<compile_context>
chip_gen: v7x
topology: tpu7x:2x2x1
jax: 0.10.0
libtpu: 0.0.40
codegen_flags: <defaults>
</compile_context>

<pallas_src>
import functools

import jax
import jax.numpy as jnp
from jax.experimental import pallas as pl
from jax.experimental.pallas import tpu as pltpu


def _clamp_kernel(x_ref, o_ref, *, min_val, max_val):
    # min-then-max ordering matches torch.clamp semantics (max wins when
    # min > max). Pure VPU elementwise work, hidden behind the HBM stream.
    o_ref[...] = jnp.minimum(jnp.maximum(x_ref[...], min_val), max_val)


_LANE_WIDTHS = (4096, 2048, 1024, 512, 256, 128)
_TINY_ELEMS = 1024  # below this, pallas_call launch/pipeline setup dominates


def _vmem_capacity_bytes():
    """Best-effort physical VMEM size per TensorCore."""
    try:
        info = pltpu.get_tpu_info()
        for attr in ("vmem_capacity_bytes", "vmem_bytes", "vmem_size_bytes"):
            val = getattr(info, attr, None)
            if val:
                return int(val)
    except Exception:
        pass
    try:
        kind = jax.devices()[0].device_kind.lower()
    except Exception:
        kind = ""
    if (not kind) or ("7" in kind):
        return 64 * 1024 * 1024          # v7x-class (or unknown): be conservative
    return 128 * 1024 * 1024             # v4 / v5e / v5p / v6e


def _block_budget():
    """Returns (target_block_bytes, vmem_limit_bytes) tuned per generation."""
    if _vmem_capacity_bytes() <= 64 * 1024 * 1024:
        # v7x: 64 MiB VMEM/TC -> 8 MiB blocks; 2 in-bufs + 2 out-bufs = 32 MiB.
        return 8 * 1024 * 1024, 48 * 1024 * 1024
    # v5e/v6e: 128 MiB VMEM -> 16 MiB blocks keep per-step overhead <2%.
    return 16 * 1024 * 1024, 80 * 1024 * 1024


def clamp_pallas(x, min_val=0.0, max_val=1.0, *, inplace=False):
    """Elementwise clamp of an arbitrary-shaped array via a Pallas TPU kernel."""
    orig_shape = x.shape
    dtype = x.dtype
    n = x.size
    if n == 0:
        return x

    if jnp.issubdtype(dtype, jnp.integer):
        # TODO(synk): float bounds on integer tensors are truncated here rather
        # than following torch's type-promotion rules (default 0/1 is exact).
        min_s, max_s = int(min_val), int(max_val)
    else:
        min_s, max_s = float(min_val), float(max_val)

    itemsize = jnp.dtype(dtype).itemsize

    # Lane-dense slab width: widest multiple of 128 dividing n exactly
    # -> no padding, no post-slice copy.
    width = next((w for w in _LANE_WIDTHS if n % w == 0), None)

    # Fast path: tiny or 128-unaligned inputs. A fused XLA clip is a single
    # HBM read+write pass (already at the roofline) and avoids the old
    # pad + kernel + slice fallback (2-3x HBM traffic).
    if n < _TINY_ELEMS or width is None:
        return jnp.clip(x, min_s, max_s)

    rows = n // width
    x2d = x.reshape(rows, width)

    # Dtype-aware sublane granularity: 8 rows (f32), 16 (bf16/f16), 32 (i8/fp8).
    mult = max(8, 32 // itemsize)

    block_bytes, vmem_limit = _block_budget()
    target_rows = max(mult, (block_bytes // (width * itemsize)) // mult * mult)
    block_rows = rows if rows <= target_rows else target_rows

    # Guarantee >= 2 grid steps whenever row count permits so the "parallel"
    # axis can shard across v7x's two TensorCores and the DMA pipeline can
    # overlap even on single-core chips.
    if block_rows == rows and rows > mult:
        block_rows = max(mult, (pl.cdiv(rows, 2) // mult) * mult)

    grid = (pl.cdiv(rows, block_rows),)  # last block may be partial (masked)

    kernel = functools.partial(_clamp_kernel, min_val=min_s, max_val=max_s)

    out2d = pl.pallas_call(
        kernel,
        out_shape=jax.ShapeDtypeStruct((rows, width), dtype),
        grid=grid,
        in_specs=[pl.BlockSpec((block_rows, width), lambda i: (i, 0))],
        out_specs=pl.BlockSpec((block_rows, width), lambda i: (i, 0)),
        compiler_params=pltpu.CompilerParams(
            dimension_semantics=("parallel",),
            vmem_limit_bytes=vmem_limit,
        ),
        cost_estimate=pl.CostEstimate(
            flops=2 * n, transcendentals=0, bytes_accessed=2 * n * itemsize),
        input_output_aliases={0: 0} if inplace else {},
    )(x2d)

    return out2d.reshape(orig_shape)


class ClampPallas:
    """JAX/Pallas equivalent of the PyTorch Clamp module."""

    def __init__(self, min=0, max=1, inplace=False):
        self.min = min
        self.max = max
        self.inplace = inplace

    def __call__(self, x):
        return clamp_pallas(x, self.min, self.max, inplace=self.inplace)


if __name__ == "__main__":
    module = ClampPallas(min=0, max=1)

    # NCHW feature map (n=2048, aligned) -> Pallas path, single block.
    x = jax.random.normal(jax.random.PRNGKey(0), (2, 4, 16, 16), dtype=jnp.float32) * 3.0
    y = jax.block_until_ready(module(x))
    assert y.shape == x.shape and y.dtype == x.dtype
    assert jnp.allclose(y, jnp.clip(x, 0.0, 1.0)), "mismatch vs reference clamp"

    # Multi-block path with a partial (masked) last block: rows=9, block_rows=8.
    x2 = jax.random.normal(jax.random.PRNGKey(1), (9, 128), dtype=jnp.float32) * 2.0
    y2 = jax.block_until_ready(clamp_pallas(x2, 0.0, 1.0))
    assert jnp.allclose(y2, jnp.clip(x2, 0.0, 1.0))

    # bf16 path (dtype-aware sublane rounding).
    x3 = (jax.random.normal(jax.random.PRNGKey(2), (2, 8, 32, 32)) * 2.0).astype(jnp.bfloat16)
    y3 = jax.block_until_ready(clamp_pallas(x3, 0.0, 1.0))
    assert y3.dtype == jnp.bfloat16 and jnp.allclose(y3, jnp.clip(x3, 0.0, 1.0))

    # Tiny / 128-unaligned shape -> fused XLA fast path (no pad, no slice).
    x4 = jax.random.normal(jax.random.PRNGKey(3), (3, 5, 7), dtype=jnp.float32) * 2.0
    y4 = jax.block_until_ready(clamp_pallas(x4, 0.0, 1.0))
    assert y4.shape == x4.shape and jnp.allclose(y4, jnp.clip(x4, 0.0, 1.0))

    print("KERNEL_OK")
</pallas_src>

<mosaic_0001>
module attributes {stable_mosaic.version = 11 : i64} {
  func.func @_clamp_kernel(%arg0: i32, %arg1: memref<1x2048xf32, #tpu.memory_space<vmem>>, %arg2: memref<1x2048xf32, #tpu.memory_space<vmem>>) attributes {dimension_semantics = [#tpu.dimension_semantics<parallel>], iteration_bounds = array<i64: 1>, scalar_prefetch = 0 : i64, scratch_operands = 0 : i64, tpu.core_type = #tpu.core_type<tc>, window_params = [{transform_indices = @transform_0, window_bounds = array<i64: 1, 2048>}, {transform_indices = @transform_1, window_bounds = array<i64: 1, 2048>}]} {
    %c0 = arith.constant 0 : index
    %c0_0 = arith.constant 0 : index
    %0 = vector.load %arg1[%c0, %c0_0] : memref<1x2048xf32, #tpu.memory_space<vmem>>, vector<1x2048xf32>
    %cst = arith.constant 0.000000e+00 : f32
    %1 = vector.broadcast %cst : f32 to vector<1x2048xf32>
    %2 = arith.maximumf %0, %1 : vector<1x2048xf32>
    %cst_1 = arith.constant 1.000000e+00 : f32
    %3 = vector.broadcast %cst_1 : f32 to vector<1x2048xf32>
    %4 = arith.minimumf %2, %3 : vector<1x2048xf32>
    %c0_2 = arith.constant 0 : index
    %c0_3 = arith.constant 0 : index
    %5 = vector.load %arg2[%c0_2, %c0_3] : memref<1x2048xf32, #tpu.memory_space<vmem>>, vector<1x2048xf32>
    tpu.vector_store %arg2[%c0_2, %c0_3], %4 {strides = array<i32>} : memref<1x2048xf32, #tpu.memory_space<vmem>>, vector<1x2048xf32>,
    return
  }
  func.func @transform_0(%arg0: i32) -> (i32, i32) {
    %c0_i32 = arith.constant 0 : i32
    %c0_i32_0 = arith.constant 0 : i32
    return %arg0, %c0_i32 : i32, i32
  }
  func.func @transform_1(%arg0: i32) -> (i32, i32) {
    %c0_i32 = arith.constant 0 : i32
    %c0_i32_0 = arith.constant 0 : i32
    return %arg0, %c0_i32 : i32, i32
  }
}

</mosaic_0001>

<llo_original>
// kernel: tpu_custom_call.1
$region0: #{tpu_custom_call.1}
  #allocation0 [shape = 'u32[]', space=smem, size = 0x4, offset = 0x4, fixed_abs, tag = 'smem constant byte address 0x4 - core index']
  #allocation1 [shape = 'u32[144,128]{1,0:T(1,128)}', space=vmem, size = 0x12000, scoped, tag = 'internal scratch']
  %s0 = inlined_call_operand.hbm [shape: f32[1,2048], index: 0, kind: input, shape index: {}]
  %s1 = inlined_call_operand.hbm [shape: f32[1,2048], index: 1, kind: output, shape index: {}]
  %s2 = sld [smem:[#allocation0]]
  $region18: #{tpu_custom_call.1} parent=0
    _
  %s4 = ssub.s32 1, %s2
  %s5 = scalar_select 0, %s4, %s2
  $region1: #{tpu_custom_call.1} parent=0
    #allocation2 [shape = 'u8[8192]{0}', space=vmem, size = 0x2000, scoped, tag = 'input window, operand 0, single buffered']
    #allocation3 [shape = 's32[1]{0}', space=sflag, size = 0x4, scoped, tag = 'scoped memory for tpu_custom_call.1']
    #allocation4 [shape = 's32[1]{0}', space=sflag, size = 0x4, scoped, tag = 'scoped memory for tpu_custom_call.1']
    #allocation5 [shape = 'u8[8192]{0}', space=vmem, size = 0x2000, scoped, tag = 'output window, operand 0, single buffered']
    %6 = vsyncpa [#allocation3], 0
    %7 = vsyncpa [#allocation4], 0
    // Predicated region
    $region2: #{tpu_custom_call.1} parent=1 // pred_check
      _
    $region3: #{tpu_custom_call.1} parent=1 // pred_check_branch
      %9 = sbr.rel (0) target = $region5
    $region4: #{tpu_custom_call.1} parent=1 // pred_region
      %s11 = ssub.s32 256, 256
      %12 = vsyncadd [#allocation3], %s11
      %s14 = sshll.u32 [#allocation2], 4
      %s15 = int_to_ptr.vmem [resolvable:$true] %s14
      %17 = dma.hbm_to_vmem [thread:$0]  %s0, 256, %s15, [#allocation3]
    $region5: #{tpu_custom_call.1} parent=1 // pred_fallthru
      _
    // Predicated region
    $region6: #{tpu_custom_call.1} parent=1 // pred_check
      _
    $region7: #{tpu_custom_call.1} parent=1 // pred_check_branch
      %19 = sbr.rel (0) target = $region9
    $region8: #{tpu_custom_call.1} parent=1 // pred_region
      %20 = dma.done [#allocation3], 256
    $region9: #{tpu_custom_call.1} parent=1 // pred_fallthru
      _
    %v21 = vld [vmem:[#allocation2] sm:$0xff]
    %v22 = vld [vmem:[#allocation2 + $0x8] sm:$0xff]
    %v23 = vmax.f32 %v21, 0.0
    %v24 = vmax.f32 %v22, 0.0
    %v25 = vmin.f32 %v23, 1.0
    %v26 = vmin.f32 %v24, 1.0
    %27 = vst [vmem:[#allocation5] sm:$0xff] %v25
    %28 = vst [vmem:[#allocation5 + $0x8] sm:$0xff] %v26
    // Predicated region
    $region10: #{tpu_custom_call.1} parent=1 // pred_check
      _
    $region11: #{tpu_custom_call.1} parent=1 // pred_check_branch
      %30 = sbr.rel (0) target = $region13
    $region12: #{tpu_custom_call.1} parent=1 // pred_region
      %s32 = ssub.s32 256, 256
      %33 = vsyncadd [#allocation4], %s32
      %s35 = sshll.u32 [#allocation5], 4
      %s36 = int_to_ptr.vmem [resolvable:$true] %s35
      %38 = dma.vmem_to_hbm [thread:$0]  %s36, 256, %s1, [#allocation4]
    $region13: #{tpu_custom_call.1} parent=1 // pred_fallthru
      _
    // Predicated region
    $region14: #{tpu_custom_call.1} parent=1 // pred_check
      _
    $region15: #{tpu_custom_call.1} parent=1 // pred_check_branch
      %40 = sbr.rel (0) target = $region17
    $region16: #{tpu_custom_call.1} parent=1 // pred_region
      %41 = dma.done [#allocation4], 256
    $region17: #{tpu_custom_call.1} parent=1 // pred_fallthru
      _
    %42 = vsyncpa [#allocation3], 1
    %43 = vsyncpa [#allocation4], 1

</llo_original>
